<compile_context>
chip_gen: v7x
topology: tpu7x:2x2x1
jax: 0.10.0
libtpu: 0.0.40
codegen_flags: <defaults>
</compile_context>

<pallas_src>
import functools

import jax
import jax.numpy as jnp
from jax.experimental import pallas as pl
from jax.experimental.pallas import tpu as pltpu

_LANES = 128  # lane-padded slab width for 1-wide outputs (probe, per-row NLL)


def _round_up(x: int, m: int) -> int:
    return (x + m - 1) // m * m


def _pick_tk(h: int) -> int:
    """Largest reduction tile in {512,384,256,128} dividing H, else H."""
    if h <= 512:
        return h
    for t in (512, 384, 256, 128):
        if h % t == 0:
            return t
    return h  # rare fallback: single K step


def _device_config():
    """Device-aware row/vocab tiles and scoped-VMEM cap."""
    kind = ""
    try:
        kind = jax.devices()[0].device_kind.lower()
    except Exception:
        pass
    if "v5e" in kind or "v5 lite" in kind or "v5lite" in kind:
        # balance ~240 flops / lm_w byte -> tm=256 reaches compute bound
        return dict(tm=256, tn=1024, vmem=100 << 20)
    if "v6" in kind or "trillium" in kind:
        # balance ~650 flops / lm_w byte -> tm>=512, fat vocab tiles
        return dict(tm=512, tn=2048, vmem=100 << 20)
    if "v7" in kind or "tpu7" in kind or "7x" in kind:
        # 64 MiB VMEM per TC -> moderate tiles, conservative cap
        return dict(tm=384, tn=1024, vmem=56 << 20)
    return dict(tm=256, tn=1024, vmem=48 << 20)


# ------------------- kernel 1: hooked layer + probe head ---------------------
def _hooked_probe_kernel(x_ref, lw_ref, lb_ref, pw_ref, pb_ref,
                         hooked_ref, probe_ref, acc_ref, *, nk):
    k = pl.program_id(1)

    @pl.when(k == 0)
    def _():
        acc_ref[...] = jnp.broadcast_to(lb_ref[...], acc_ref.shape
                                        ).astype(jnp.float32)

    acc_ref[...] += jnp.dot(x_ref[...], lw_ref[...],
                            preferred_element_type=jnp.float32)

    @pl.when(k == nk - 1)
    def _():
        # TODO(synk): hooked activations are rounded to bf16 for the MXU;
        # the PyTorch reference keeps the model dtype end-to-end.
        h_bf16 = acc_ref[...].astype(hooked_ref.dtype)
        hooked_ref[...] = h_bf16
        # probe head into a lane-padded (tm, 128) slab; only column 0 is the
        # real probe output (probe weights beyond column 0 are zero).
        probe_ref[...] = jnp.dot(h_bf16, pw_ref[...],
                                 preferred_element_type=jnp.float32) + pb_ref[...]


def _hooked_probe_pallas(x_p, layer_w, layer_b2d, probe_w_p, probe_b2d,
                         *, tm, vmem_limit):
    m_pad, H = x_p.shape
    tk = _pick_tk(H)
    nk = H // tk
    grid = (m_pad // tm, nk)

    kernel = functools.partial(_hooked_probe_kernel, nk=nk)
    hooked, probe = pl.pallas_call(
        kernel,
        out_shape=(jax.ShapeDtypeStruct((m_pad, H), jnp.bfloat16),
                   jax.ShapeDtypeStruct((m_pad, _LANES), jnp.float32)),
        grid_spec=pltpu.PrefetchScalarGridSpec(
            num_scalar_prefetch=0,
            grid=grid,
            in_specs=[
                pl.BlockSpec((tm, tk), lambda i, k: (i, k)),          # x rows
                pl.BlockSpec((tk, H), lambda i, k: (k, 0)),           # layer_w
                pl.BlockSpec((1, H), lambda i, k: (0, 0)),            # layer_b
                pl.BlockSpec((H, _LANES), lambda i, k: (0, 0)),       # probe_w
                pl.BlockSpec((1, _LANES), lambda i, k: (0, 0)),       # probe_b
            ],
            out_specs=[
                pl.BlockSpec((tm, H), lambda i, k: (i, 0)),           # hooked
                pl.BlockSpec((tm, _LANES), lambda i, k: (i, 0)),      # probe slab
            ],
            scratch_shapes=[pltpu.VMEM((tm, H), jnp.float32)],
        ),
        compiler_params=pltpu.CompilerParams(
            dimension_semantics=("parallel", "arbitrary"),
            vmem_limit_bytes=vmem_limit,
        ),
    )(x_p, layer_w, layer_b2d, probe_w_p, probe_b2d)
    return hooked, probe


# ---------------- kernel 2: lm_head (+ optional fused cross-entropy) ---------
def _lm_head_kernel(*refs, tk, nk, tn, vocab, with_loss):
    if with_loss:
        (h_ref, lmw_ref, lmb_ref, lab_ref,
         lm_ref, nll_ref, acc_ref, m_scr, s_scr, t_scr) = refs
    else:
        h_ref, lmw_ref, lmb_ref, lm_ref, acc_ref = refs

    j = pl.program_id(1)
    k = pl.program_id(2)
    nj = pl.num_programs(1)

    @pl.when(k == 0)
    def _():
        acc_ref[...] = jnp.broadcast_to(lmb_ref[...], acc_ref.shape
                                        ).astype(jnp.float32)

    if with_loss:
        @pl.when(jnp.logical_and(j == 0, k == 0))
        def _():
            m_scr[...] = jnp.full_like(m_scr, -jnp.inf)
            s_scr[...] = jnp.zeros_like(s_scr)
            t_scr[...] = jnp.zeros_like(t_scr)

    if nk == 1:
        h_tile = h_ref[...]
    else:
        kk = pl.multiple_of(k * tk, tk)
        h_tile = h_ref[:, pl.ds(kk, tk)]
    acc_ref[...] += jnp.dot(h_tile, lmw_ref[...],
                            preferred_element_type=jnp.float32)

    @pl.when(k == nk - 1)
    def _():
        logits = acc_ref[...]
        lm_ref[...] = logits.astype(lm_ref.dtype)

        if with_loss:
            # online logsumexp across vocab tiles (padded columns masked out)
            col = jax.lax.broadcasted_iota(jnp.int32, logits.shape, 1) + j * tn
            masked = jnp.where(col < vocab, logits, -jnp.inf)
            tile_max = jnp.max(masked, axis=-1, keepdims=True)
            m_new = jnp.maximum(m_scr[...], tile_max)
            corr = jnp.exp(m_scr[...] - m_new)
            s_scr[...] = s_scr[...] * corr + jnp.sum(
                jnp.exp(masked - m_new), axis=-1, keepdims=True)
            m_scr[...] = m_new
            # target-logit gather (label == -100 / padded rows never match)
            hit = col == lab_ref[...]
            t_scr[...] += jnp.sum(jnp.where(hit, logits, 0.0),
                                  axis=-1, keepdims=True)

            @pl.when(j == nj - 1)
            def _():
                nll = m_scr[...] + jnp.log(s_scr[...]) - t_scr[...]
                nll_ref[...] = jnp.broadcast_to(nll, nll_ref.shape)


def _lm_head_pallas(hooked, lm_w_p, lm_b2d, labels2d, *, tm, tn, vocab,
                    vmem_limit, with_loss):
    m_pad, H = hooked.shape
    v_pad = lm_w_p.shape[1]
    tk = _pick_tk(H)
    nk = H // tk
    grid = (m_pad // tm, v_pad // tn, nk)

    in_specs = [
        pl.BlockSpec((tm, H), lambda i, j, k: (i, 0)),     # hooked rows (resident)
        pl.BlockSpec((tk, tn), lambda i, j, k: (k, j)),    # lm_w tile
        pl.BlockSpec((1, tn), lambda i, j, k: (0, j)),     # lm_b tile
    ]
    operands = [hooked, lm_w_p, lm_b2d]
    out_shape = [jax.ShapeDtypeStruct((m_pad, v_pad), jnp.bfloat16)]
    out_specs = [pl.BlockSpec((tm, tn), lambda i, j, k: (i, j))]
    scratch = [pltpu.VMEM((tm, tn), jnp.float32)]          # lm_head accumulator

    if with_loss:
        in_specs.append(pl.BlockSpec((tm, 1), lambda i, j, k: (i, 0)))
        operands.append(labels2d)
        out_shape.append(jax.ShapeDtypeStruct((m_pad, _LANES), jnp.float32))
        out_specs.append(pl.BlockSpec((tm, _LANES), lambda i, j, k: (i, 0)))
        scratch += [pltpu.VMEM((tm, 1), jnp.float32)] * 3  # running max/sum/target
        # online-softmax scratch accumulates across j -> j must stay sequential
        dims = ("parallel", "arbitrary", "arbitrary")
    else:
        dims = ("parallel", "parallel", "arbitrary")

    kernel = functools.partial(_lm_head_kernel, tk=tk, nk=nk, tn=tn,
                               vocab=vocab, with_loss=with_loss)
    outs = pl.pallas_call(
        kernel,
        out_shape=tuple(out_shape),
        grid_spec=pltpu.PrefetchScalarGridSpec(
            num_scalar_prefetch=0,
            grid=grid,
            in_specs=in_specs,
            out_specs=out_specs,
            scratch_shapes=scratch,
        ),
        compiler_params=pltpu.CompilerParams(
            dimension_semantics=dims,
            vmem_limit_bytes=vmem_limit,
        ),
    )(*operands)

    if with_loss:
        lm_pad, nll_pad = outs
        return lm_pad, nll_pad
    (lm_pad,) = outs
    return lm_pad, None


# ------------------------------ HookedModel wrapper --------------------------
class HookedModelPallas:
    """JAX/Pallas analogue of HookedModel: synthetic hooked LM + LinearHead probe."""

    def __init__(self, vocab_size: int, hidden_size: int, seed: int = 0):
        cfg = _device_config()
        self._tm_target = cfg["tm"]
        self._vmem_limit = cfg["vmem"]
        self._tn = min(cfg["tn"], _round_up(vocab_size, _LANES))
        self._v_pad = _round_up(vocab_size, self._tn)
        self.vocab_size = vocab_size
        self.hidden_size = hidden_size

        k0, k1, k2, k3 = jax.random.split(jax.random.PRNGKey(seed), 4)
        H, V = hidden_size, vocab_size
        # TODO(synk): the wrapped PreTrainedModel transformer stack (and its
        # forward-hook machinery) has no clean Pallas equivalent; a
        # deterministic embedding + one dense layer stands in for the hooked
        # target layer whose output the forward hook captures.
        self.embed = (jax.random.normal(k0, (V, H), jnp.float32)
                      * 0.02).astype(jnp.bfloat16)

        # All weight casting / padding hoisted here (done once, not per call).
        self.layer_w = (jax.random.normal(k1, (H, H), jnp.float32)
                        * 0.02).astype(jnp.bfloat16)
        self.layer_b2d = jnp.zeros((1, H), jnp.float32)

        lm_w = (jax.random.normal(k2, (H, V), jnp.float32)
                * 0.02).astype(jnp.bfloat16)
        lm_b = jnp.zeros((V,), jnp.float32)
        self.lm_w_p = (jnp.pad(lm_w, ((0, 0), (0, self._v_pad - V)))
                       if self._v_pad != V else lm_w)
        self.lm_b2d = (jnp.pad(lm_b, (0, self._v_pad - V))
                       if self._v_pad != V else lm_b).reshape(1, self._v_pad)

        # LinearHead: nn.Linear(hidden_size, 1); weight ~ N(0, 0.01), bias = 0.
        probe_w = (jax.random.normal(k3, (H, 1), jnp.float32)
                   * 0.01).astype(jnp.bfloat16)
        self.probe_w_p = jnp.pad(probe_w, ((0, 0), (0, _LANES - 1)))
        self.probe_b2d = jnp.zeros((1, _LANES), jnp.float32)

    def forward(self, input_ids, attention_mask=None, labels=None):
        # TODO(synk): attention_mask is accepted but (like the stand-in LM)
        # unused; only the -100 ignore_index masking is honored in the loss.
        del attention_mask
        input_ids = jnp.asarray(input_ids)
        B, S = input_ids.shape
        H, V = self.hidden_size, self.vocab_size
        M = B * S

        tm = min(self._tm_target, _round_up(max(M, 16), 16))
        m_pad = _round_up(M, tm)

        # Embedding lookup (gather) stays in XLA.
        x2d = self.embed[input_ids.reshape(-1)]                     # (M, H) bf16
        if m_pad != M:
            x2d = jnp.pad(x2d, ((0, m_pad - M), (0, 0)))

        hooked, probe_pad = _hooked_probe_pallas(
            x2d, self.layer_w, self.layer_b2d, self.probe_w_p, self.probe_b2d,
            tm=tm, vmem_limit=self._vmem_limit)

        with_loss = labels is not None
        labels2d = None
        next_labels = None
        if with_loss:
            labels = jnp.asarray(labels).astype(jnp.int32)
            # HF causal-LM shift: row (b, s) is scored against labels[b, s+1].
            next_labels = jnp.concatenate(
                [labels[:, 1:], jnp.full((B, 1), -100, jnp.int32)],
                axis=1).reshape(-1)
            nl_pad = (jnp.pad(next_labels, (0, m_pad - M), constant_values=-100)
                      if m_pad != M else next_labels)
            labels2d = nl_pad.reshape(m_pad, 1)

        lm_pad, nll_pad = _lm_head_pallas(
            hooked, self.lm_w_p, self.lm_b2d, labels2d,
            tm=tm, tn=self._tn, vocab=V, vmem_limit=self._vmem_limit,
            with_loss=with_loss)

        lm_logits = lm_pad[:M, :V].reshape(B, S, V)       # bf16
        probe_logits = probe_pad[:M, :1].reshape(B, S, 1)  # f32
        result = {"lm_logits": lm_logits, "probe_logits": probe_logits}

        if with_loss:
            nll = nll_pad[:M, 0]
            valid = next_labels != -100
            denom = jnp.maximum(jnp.sum(valid), 1)
            result["lm_loss"] = jnp.sum(jnp.where(valid, nll, 0.0)) / denom

        return result

    __call__ = forward


# ------------------------------------ main ------------------------------------
if __name__ == "__main__":
    B, S, H, V = 2, 8, 32, 64
    key = jax.random.PRNGKey(0)
    k_ids, _ = jax.random.split(key)
    input_ids = jax.random.randint(k_ids, (B, S), 0, V, dtype=jnp.int32)
    attention_mask = jnp.ones((B, S), dtype=jnp.int32)
    labels = input_ids

    model = HookedModelPallas(vocab_size=V, hidden_size=H, seed=0)
    out = model(input_ids, attention_mask=attention_mask, labels=labels)
    jax.block_until_ready(out)

    assert out["lm_logits"].shape == (B, S, V)
    assert out["probe_logits"].shape == (B, S, 1)
    assert out["lm_loss"].shape == ()

    # Reference (f32 math on the same bf16 parameters; the kernel additionally
    # rounds the hooked activations to bf16).
    x2d = model.embed[input_ids.reshape(-1)].astype(jnp.float32)
    layer_w = model.layer_w.astype(jnp.float32)
    lm_w = model.lm_w_p[:, :V].astype(jnp.float32)
    lm_b = model.lm_b2d[0, :V]
    probe_w = model.probe_w_p[:, :1].astype(jnp.float32)
    probe_b = model.probe_b2d[0, :1]

    ref_hooked = x2d @ layer_w + model.layer_b2d[0]
    ref_lm = (ref_hooked @ lm_w + lm_b).reshape(B, S, V)
    ref_probe = (ref_hooked @ probe_w + probe_b).reshape(B, S, 1)

    shift_logits = ref_lm[:, :-1, :].reshape(-1, V)
    shift_labels = labels[:, 1:].reshape(-1)
    logprobs = jax.nn.log_softmax(shift_logits, axis=-1)
    ref_loss = (-jnp.take_along_axis(logprobs, shift_labels[:, None], axis=-1)
                [:, 0]).mean()

    lm_f32 = out["lm_logits"].astype(jnp.float32)
    assert bool(jnp.all(jnp.isfinite(lm_f32)))
    assert jnp.allclose(lm_f32, ref_lm, rtol=0.1, atol=3e-4)
    assert jnp.allclose(out["probe_logits"], ref_probe, rtol=0.1, atol=3e-4)
    assert jnp.allclose(out["lm_loss"], ref_loss, rtol=0.05, atol=1e-3)

    print("KERNEL_OK")
</pallas_src>

<mosaic_0001>
module attributes {stable_mosaic.version = 11 : i64} {
  func.func @_hooked_probe_kernel(%arg0: i32, %arg1: i32, %arg2: memref<16x32xbf16, #tpu.memory_space<vmem>>, %arg3: memref<32x32xbf16, #tpu.memory_space<vmem>>, %arg4: memref<1x32xf32, #tpu.memory_space<vmem>>, %arg5: memref<32x128xbf16, #tpu.memory_space<vmem>>, %arg6: memref<1x128xf32, #tpu.memory_space<vmem>>, %arg7: memref<16x32xbf16, #tpu.memory_space<vmem>>, %arg8: memref<16x128xf32, #tpu.memory_space<vmem>>, %arg9: memref<16x32xf32, #tpu.memory_space<vmem>>) attributes {dimension_semantics = [#tpu.dimension_semantics<parallel>, #tpu.dimension_semantics<arbitrary>], iteration_bounds = array<i64: 1, 1>, scalar_prefetch = 0 : i64, scratch_operands = 1 : i64, tpu.core_type = #tpu.core_type<tc>, window_params = [{transform_indices = @transform_0, window_bounds = array<i64: 16, 32>}, {transform_indices = @transform_1, window_bounds = array<i64: 32, 32>}, {pipeline_mode = #tpu.pipeline_mode<synchronous>, transform_indices = @transform_2, window_bounds = array<i64: 1, 32>}, {pipeline_mode = #tpu.pipeline_mode<synchronous>, transform_indices = @transform_3, window_bounds = array<i64: 32, 128>}, {pipeline_mode = #tpu.pipeline_mode<synchronous>, transform_indices = @transform_4, window_bounds = array<i64: 1, 128>}, {transform_indices = @transform_5, window_bounds = array<i64: 16, 32>}, {transform_indices = @transform_6, window_bounds = array<i64: 16, 128>}]} {
    %c0_i32 = arith.constant 0 : i32
    %0 = arith.cmpi eq, %arg1, %c0_i32 : i32
    %1 = arith.extui %0 : i1 to i32
    %c0_i32_0 = arith.constant 0 : i32
    %2 = arith.cmpi ne, %1, %c0_i32_0 : i32
    scf.if %2 {
      %c0_10 = arith.constant 0 : index
      %c0_11 = arith.constant 0 : index
      %12 = vector.load %arg4[%c0_10, %c0_11] : memref<1x32xf32, #tpu.memory_space<vmem>>, vector<1x32xf32>
      %13 = vector.shape_cast %12 : vector<1x32xf32> to vector<1x32xf32>
      %14 = vector.broadcast %13 : vector<1x32xf32> to vector<16x32xf32>
      %c0_12 = arith.constant 0 : index
      %c0_13 = arith.constant 0 : index
      %15 = vector.load %arg9[%c0_12, %c0_13] : memref<16x32xf32, #tpu.memory_space<vmem>>, vector<16x32xf32>
      tpu.vector_store %arg9[%c0_12, %c0_13], %14 {strides = array<i32>} : memref<16x32xf32, #tpu.memory_space<vmem>>, vector<16x32xf32>,
    } else {
    }
    %c0 = arith.constant 0 : index
    %c0_1 = arith.constant 0 : index
    %3 = vector.load %arg9[%c0, %c0_1] : memref<16x32xf32, #tpu.memory_space<vmem>>, vector<16x32xf32>
    %c0_2 = arith.constant 0 : index
    %c0_3 = arith.constant 0 : index
    %4 = vector.load %arg2[%c0_2, %c0_3] : memref<16x32xbf16, #tpu.memory_space<vmem>>, vector<16x32xbf16>
    %c0_4 = arith.constant 0 : index
    %c0_5 = arith.constant 0 : index
    %5 = vector.load %arg3[%c0_4, %c0_5] : memref<32x32xbf16, #tpu.memory_space<vmem>>, vector<32x32xbf16>
    %cst = arith.constant dense<0.000000e+00> : vector<16x32xf32>
    %6 = tpu.matmul %4, %5, %cst {dimension_numbers = #tpu.dot_dimension_numbers<[1], [0], [0], [1], [0, 0, 1, 1], [], []>} : vector<16x32xbf16>, vector<32x32xbf16>, vector<16x32xf32> -> vector<16x32xf32>
    %7 = arith.addf %3, %6 : vector<16x32xf32>
    %c0_6 = arith.constant 0 : index
    %c0_7 = arith.constant 0 : index
    %8 = vector.load %arg9[%c0_6, %c0_7] : memref<16x32xf32, #tpu.memory_space<vmem>>, vector<16x32xf32>
    tpu.vector_store %arg9[%c0_6, %c0_7], %7 {strides = array<i32>} : memref<16x32xf32, #tpu.memory_space<vmem>>, vector<16x32xf32>,
    %c0_i32_8 = arith.constant 0 : i32
    %9 = arith.cmpi eq, %arg1, %c0_i32_8 : i32
    %10 = arith.extui %9 : i1 to i32
    %c0_i32_9 = arith.constant 0 : i32
    %11 = arith.cmpi ne, %10, %c0_i32_9 : i32
    scf.if %11 {
      %c0_10 = arith.constant 0 : index
      %c0_11 = arith.constant 0 : index
      %12 = vector.load %arg9[%c0_10, %c0_11] : memref<16x32xf32, #tpu.memory_space<vmem>>, vector<16x32xf32>
      %13 = arith.truncf %12 : vector<16x32xf32> to vector<16x32xbf16>
      %c0_12 = arith.constant 0 : index
      %c0_13 = arith.constant 0 : index
      %14 = vector.load %arg7[%c0_12, %c0_13] : memref<16x32xbf16, #tpu.memory_space<vmem>>, vector<16x32xbf16>
      tpu.vector_store %arg7[%c0_12, %c0_13], %13 {strides = array<i32>} : memref<16x32xbf16, #tpu.memory_space<vmem>>, vector<16x32xbf16>,
      %c0_14 = arith.constant 0 : index
      %c0_15 = arith.constant 0 : index
      %15 = vector.load %arg5[%c0_14, %c0_15] : memref<32x128xbf16, #tpu.memory_space<vmem>>, vector<32x128xbf16>
      %cst_16 = arith.constant dense<0.000000e+00> : vector<16x128xf32>
      %16 = tpu.matmul %13, %15, %cst_16 {dimension_numbers = #tpu.dot_dimension_numbers<[1], [0], [0], [1], [0, 0, 1, 1], [], []>} : vector<16x32xbf16>, vector<32x128xbf16>, vector<16x128xf32> -> vector<16x128xf32>
      %c0_17 = arith.constant 0 : index
      %c0_18 = arith.constant 0 : index
      %17 = vector.load %arg6[%c0_17, %c0_18] : memref<1x128xf32, #tpu.memory_space<vmem>>, vector<1x128xf32>
      %18 = vector.broadcast %17 : vector<1x128xf32> to vector<16x128xf32>
      %19 = arith.addf %16, %18 : vector<16x128xf32>
      %c0_19 = arith.constant 0 : index
      %c0_20 = arith.constant 0 : index
      %20 = vector.load %arg8[%c0_19, %c0_20] : memref<16x128xf32, #tpu.memory_space<vmem>>, vector<16x128xf32>
      tpu.vector_store %arg8[%c0_19, %c0_20], %19 {strides = array<i32>} : memref<16x128xf32, #tpu.memory_space<vmem>>, vector<16x128xf32>,
    } else {
    }
    return
  }
  func.func @transform_0(%arg0: i32, %arg1: i32) -> (i32, i32) {
    %c0_i32 = arith.constant 0 : i32
    return %arg0, %arg1 : i32, i32
  }
  func.func @transform_1(%arg0: i32, %arg1: i32) -> (i32, i32) {
    %c0_i32 = arith.constant 0 : i32
    %c0_i32_0 = arith.constant 0 : i32
    return %arg1, %c0_i32 : i32, i32
  }
  func.func @transform_2(%arg0: i32, %arg1: i32) -> (i32, i32) {
    %c0_i32 = arith.constant 0 : i32
    %c0_i32_0 = arith.constant 0 : i32
    %c0_i32_1 = arith.constant 0 : i32
    return %c0_i32, %c0_i32_0 : i32, i32
  }
  func.func @transform_3(%arg0: i32, %arg1: i32) -> (i32, i32) {
    %c0_i32 = arith.constant 0 : i32
    %c0_i32_0 = arith.constant 0 : i32
    %c0_i32_1 = arith.constant 0 : i32
    return %c0_i32, %c0_i32_0 : i32, i32
  }
  func.func @transform_4(%arg0: i32, %arg1: i32) -> (i32, i32) {
    %c0_i32 = arith.constant 0 : i32
    %c0_i32_0 = arith.constant 0 : i32
    %c0_i32_1 = arith.constant 0 : i32
    return %c0_i32, %c0_i32_0 : i32, i32
  }
  func.func @transform_5(%arg0: i32, %arg1: i32) -> (i32, i32) {
    %c0_i32 = arith.constant 0 : i32
    %c0_i32_0 = arith.constant 0 : i32
    return %arg0, %c0_i32 : i32, i32
  }
  func.func @transform_6(%arg0: i32, %arg1: i32) -> (i32, i32) {
    %c0_i32 = arith.constant 0 : i32
    %c0_i32_0 = arith.constant 0 : i32
    return %arg0, %c0_i32 : i32, i32
  }
}

</mosaic_0001>

<llo_original>
// kernel: tpu_custom_call.1
$region0: #{tpu_custom_call.1}
  #allocation0 [shape = 'u32[]', space=smem, size = 0x4, offset = 0x4, fixed_abs, tag = 'smem constant byte address 0x4 - core index']
  #allocation1 [shape = 'u32[144,128]{1,0:T(1,128)}', space=vmem, size = 0x12000, scoped, tag = 'internal scratch']
  #allocation2 [shape = 'f32[16,32]{1,0:T(8,128)}', space=vmem, size = 0x2000, scoped, tag = 'scratch operand']
  %s0 = inlined_call_operand.hbm [shape: bf16[16,32], index: 0, kind: input, shape index: {}]
  %s1 = inlined_call_operand.hbm [shape: bf16[32,32], index: 1, kind: input, shape index: {}]
  %s2 = inlined_call_operand.vmem [shape: f32[1,32], index: 2, kind: input, shape index: {}]
  %s3 = inlined_call_operand.hbm [shape: bf16[32,128], index: 3, kind: input, shape index: {}]
  %s4 = inlined_call_operand.vmem [shape: f32[1,128], index: 4, kind: input, shape index: {}]
  %s5 = inlined_call_operand.hbm [shape: bf16[16,32], index: 5, kind: output, shape index: {0}]
  %s6 = inlined_call_operand.hbm [shape: f32[16,128], index: 6, kind: output, shape index: {1}]
  %7 = xla_tuple %s5, %s6
  %s8 = sld [smem:[#allocation0]]
  $region58: #{tpu_custom_call.1} parent=0
    _
  %s10 = ssub.s32 1, %s8
  %s11 = scalar_select 0, %s10, %s8
  $region1: #{tpu_custom_call.1} parent=0
    #allocation3 [shape = 'u8[4096]{0}', space=vmem, size = 0x1000, scoped, tag = 'input window, operand 0, single buffered']
    #allocation4 [shape = 's32[1]{0}', space=sflag, size = 0x4, scoped, tag = 'scoped memory for tpu_custom_call.1']
    #allocation5 [shape = 's32[1]{0}', space=sflag, size = 0x4, scoped, tag = 'scoped memory for tpu_custom_call.1']
    #allocation6 [shape = 'u8[8192]{0}', space=vmem, size = 0x2000, scoped, tag = 'input window, operand 1, single buffered']
    #allocation7 [shape = 's32[1]{0}', space=sflag, size = 0x4, scoped, tag = 'scoped memory for tpu_custom_call.1']
    #allocation8 [shape = 'u8[8192]{0}', space=vmem, size = 0x2000, scoped, tag = 'input window, operand 3, single buffered']
    #allocation9 [shape = 'u8[4096]{0}', space=vmem, size = 0x1000, scoped, tag = 'output window, operand 0, single buffered']
    #allocation10 [shape = 'u8[8192]{0}', space=vmem, size = 0x2000, scoped, tag = 'output window, operand 1, single buffered']
    #allocation11 [shape = 's32[1]{0}', space=sflag, size = 0x4, scoped, tag = 'scoped memory for tpu_custom_call.1']
    %12 = vsyncpa [#allocation4], 0
    %13 = vsyncpa [#allocation7], 0
    %14 = vsyncpa [#allocation5], 0
    %15 = vsyncpa [#allocation11], 0
    // Predicated region
    $region2: #{tpu_custom_call.1} parent=1 // pred_check
      _
    $region3: #{tpu_custom_call.1} parent=1 // pred_check_branch
      %17 = sbr.rel (0) target = $region5
    $region4: #{tpu_custom_call.1} parent=1 // pred_region
      %s19 = ssub.s32 128, 128
      %20 = vsyncadd [#allocation4], %s19
      %s21 = sshll.u32 [#allocation3], 4
      %s22 = int_to_ptr.vmem [resolvable:$true] %s21
      %27 = dma.hbm_to_vmem [thread:$0]  %s0, 128, %s22, [#allocation4], 64, 64, 4
    $region5: #{tpu_custom_call.1} parent=1 // pred_fallthru
      _
    // Predicated region
    $region6: #{tpu_custom_call.1} parent=1 // pred_check
      _
    $region7: #{tpu_custom_call.1} parent=1 // pred_check_branch
      %29 = sbr.rel (0) target = $region9
    $region8: #{tpu_custom_call.1} parent=1 // pred_region
      %s31 = ssub.s32 256, 256
      %32 = vsyncadd [#allocation7], %s31
      %s33 = sshll.u32 [#allocation6], 4
      %s34 = int_to_ptr.vmem [resolvable:$true] %s33
      %39 = dma.hbm_to_vmem [thread:$0]  %s1, 256, %s34, [#allocation7], 64, 64, 4
    $region9: #{tpu_custom_call.1} parent=1 // pred_fallthru
      _
    // Predicated region
    $region10: #{tpu_custom_call.1} parent=1 // pred_check
      _
    $region11: #{tpu_custom_call.1} parent=1 // pred_check_branch
      %41 = sbr.rel (0) target = $region13
    $region12: #{tpu_custom_call.1} parent=1 // pred_region
      _
    $region13: #{tpu_custom_call.1} parent=1 // pred_fallthru
      _
    // Predicated region
    $region14: #{tpu_custom_call.1} parent=1 // pred_check
      _
    $region15: #{tpu_custom_call.1} parent=1 // pred_check_branch
      %43 = sbr.rel (0) target = $region17
    $region16: #{tpu_custom_call.1} parent=1 // pred_region
      %s45 = ssub.s32 256, 256
      %46 = vsyncadd [#allocation7], %s45
      %s47 = sshll.u32 [#allocation8], 4
      %s48 = int_to_ptr.vmem [resolvable:$true] %s47
      %53 = dma.hbm_to_vmem [thread:$0]  %s3, 256, %s48, [#allocation7], 64, 64, 4
    $region17: #{tpu_custom_call.1} parent=1 // pred_fallthru
      _
    // Predicated region
    $region18: #{tpu_custom_call.1} parent=1 // pred_check
      _
    $region19: #{tpu_custom_call.1} parent=1 // pred_check_branch
      %55 = sbr.rel (0) target = $region21
    $region20: #{tpu_custom_call.1} parent=1 // pred_region
      _
    $region21: #{tpu_custom_call.1} parent=1 // pred_fallthru
      _
    // Predicated region
    $region22: #{tpu_custom_call.1} parent=1 // pred_check
      _
    $region23: #{tpu_custom_call.1} parent=1 // pred_check_branch
      %57 = sbr.rel (0) target = $region25
    $region24: #{tpu_custom_call.1} parent=1 // pred_region
      %58 = dma.done [#allocation4], 128
    $region25: #{tpu_custom_call.1} parent=1 // pred_fallthru
      _
    // Predicated region
    $region26: #{tpu_custom_call.1} parent=1 // pred_check
      _
    $region27: #{tpu_custom_call.1} parent=1 // pred_check_branch
      %60 = sbr.rel (0) target = $region29
    $region28: #{tpu_custom_call.1} parent=1 // pred_region
      %61 = dma.done [#allocation7], 256
    $region29: #{tpu_custom_call.1} parent=1 // pred_fallthru
      _
    // Predicated region
    $region30: #{tpu_custom_call.1} parent=1 // pred_check
      _
    $region31: #{tpu_custom_call.1} parent=1 // pred_check_branch
      %63 = sbr.rel (0) target = $region33
    $region32: #{tpu_custom_call.1} parent=1 // pred_region
      %64 = dma.done [#allocation7], 256
    $region33: #{tpu_custom_call.1} parent=1 // pred_fallthru
      _
    %p66 = scmp.eq.s32.totalorder 0, 0
    // Predicated region
    $region34: #{tpu_custom_call.1} parent=1 // pred_check
      %p67 = pneg %p66
    $region35: #{tpu_custom_call.1} parent=1 // pred_check_branch
      %69 = sbr.rel (%p67) target = $region37
    $region36: #{tpu_custom_call.1} parent=1 // pred_region
      %v70 = vld [vmem:[%s2] sm:$0x1]
      %v72 = vlaneseq
      %v73 = vshrl.u32 %v72, 7
      %v74 = vsub.s32 0, %v73
      %v75 = vrot.slane %v70, %v74
      %vm77 = vcmask 261120
      %78 = vst.msk [vmem:[#allocation2] sm:$0xff] %vm77, %v75
      %79 = vst.msk [vmem:[#allocation2 + $0x8] sm:$0xff] %vm77, %v75
    $region37: #{tpu_custom_call.1} parent=1 // pred_fallthru
      _
    %v80 = vld [vmem:[#allocation2] sm:$0xff]
    %v81 = vld [vmem:[#allocation2 + $0x8] sm:$0xff]
    %v82 = vld [vmem:[#allocation3] sm:$0xf]
    %v83 = vld [vmem:[#allocation3 + $0x4] sm:$0xf]
    %v84 = vld [vmem:[#allocation6] sm:$0xf]
    %v85 = vld [vmem:[#allocation6 + $0x4] sm:$0xf]
    %v86 = vld [vmem:[#allocation6 + $0x8] sm:$0xf]
    %v87 = vld [vmem:[#allocation6 + $0xc] sm:$0xf]
    %v90 = vunpack.c.l.b16 %v82
    %v91 = vunpack.c.l.b16 %v83
    %v92 = vpack.c.b16 %v91, %v90
    %v97 = vunpack.c.l.b16 %v84
    %v98 = vunpack.c.l.b16 %v85
    %v99 = vunpack.c.l.b16 %v86
    %v100 = vunpack.c.l.b16 %v87
    %v101 = vpack.c.b16 %v98, %v97
    %v102 = vpack.c.b16 %v100, %v99
    %vm105 = vcmask 261120
    %v107 = vsel %vm105, %v92, 0
    %109 = vmatprep.subr.bf16.mxu0 0
    %110 = vmatpush1.bf16.msra.mxu0 %v101
    %111 = vmatprep.subr.bf16.mxu0 0
    %112 = vmatpush1.bf16.msra.mxu0 %v102
    %113 = vmatprep.subr.bf16.mxu0 0
    %114 = vmatpush1.bf16.msra.mxu0 0
    %115 = vmatprep.subr.bf16.mxu0 0
    %116 = vmatpush1.bf16.msra.mxu0 0
    %117 = vmatprep.subr.bf16.mxu0 0
    %118 = vmatpush1.bf16.msra.mxu0 0
    %119 = vmatprep.subr.bf16.mxu0 0
    %120 = vmatpush1.bf16.msra.mxu0 0
    %121 = vmatprep.subr.bf16.mxu0 0
    %122 = vmatpush1.bf16.msra.mxu0 0
    %123 = vmatprep.subr.bf16.mxu0 0
    %124 = vmatpush1.bf16.msra.mxu0 0
    %125 = vmatprep.subr.bf16.mxu0 0
    %126 = vmatpush1.bf16.msra.mxu0 0
    %127 = vmatprep.subr.bf16.mxu0 0
    %128 = vmatpush1.bf16.msra.mxu0 0
    %129 = vmatprep.subr.bf16.mxu0 0
    %130 = vmatpush1.bf16.msra.mxu0 0
    %131 = vmatprep.subr.bf16.mxu0 0
    %132 = vmatpush1.bf16.msra.mxu0 0
    %133 = vmatprep.subr.bf16.mxu0 0
    %134 = vmatpush1.bf16.msra.mxu0 0
    %135 = vmatprep.subr.bf16.mxu0 0
    %136 = vmatpush1.bf16.msra.mxu0 0
    %137 = vmatprep.subr.bf16.mxu0 0
    %138 = vmatpush1.bf16.msra.mxu0 0
    %139 = vmatprep.subr.bf16.mxu0 0
    %140 = vmatpush1.bf16.msra.mxu0 0
    %141 = vmatprep.mubr.bf16.mxu0 0
    %142 = vmatmul.mubr.bf16.gmra.mrb[0].mxu0 %v107
    %v143 = vpop.f32.mrb[0].mxu0
    %v144 = vadd.f32 0.0, %v143
    %v145 = vpop.f32.mrb[0].mxu0
    %v146 = vpop.f32.mrb[0].mxu0
    %v147 = vadd.f32 0.0, %v146
    %v148 = vpop.f32.mrb[0].mxu0
    %149 = vdwg.mxu0
    %v150 = vadd.f32 %v80, %v144
    %v151 = vadd.f32 %v81, %v147
    %152 = vst.msk [vmem:[#allocation2] sm:$0xff] %vm105, %v150
    %153 = vst.msk [vmem:[#allocation2 + $0x8] sm:$0xff] %vm105, %v151
    // Predicated region
    $region38: #{tpu_custom_call.1} parent=1 // pred_check
      %p154 = pneg %p66
    $region39: #{tpu_custom_call.1} parent=1 // pred_check_branch
      %156 = sbr.rel (%p154) target = $region41
    $region40: #{tpu_custom_call.1} parent=1 // pred_region
      %v157 = vld [vmem:[#allocation2] sm:$0xff]
      %v158 = vld [vmem:[#allocation2 + $0x8] sm:$0xff]
      %v159 = vpack.c.bf16 %v158, %v157
      %v161 = vunpack.c.l.b16 %v159
      %v162 = vunpack.c.h.b16 %v159
      %v163 = vpack.c.b16 %v161, %v161
      %v164 = vpack.c.b16 %v162, %v162
      %vm167 = vcmask 257024
      %168 = vst.msk [vmem:[#allocation9] sm:$0xf] %vm167, %v163
      %169 = vst.msk [vmem:[#allocation9 + $0x4] sm:$0xf] %vm167, %v164
      %v170 = vld [vmem:[#allocation8] sm:$0xf]
      %v171 = vld [vmem:[#allocation8 + $0x4] sm:$0xf]
      %v172 = vld [vmem:[#allocation8 + $0x8] sm:$0xf]
      %v173 = vld [vmem:[#allocation8 + $0xc] sm:$0xf]
      %v174 = vld [vmem:[%s4] sm:$0x1]
      %v176 = vlaneseq
      %v177 = vshrl.u32 %v176, 7
      %v178 = vsub.s32 0, %v177
      %v179 = vrot.slane %v174, %v178
      %v185 = vunpack.c.l.b16 %v170
      %v186 = vunpack.c.l.b16 %v171
      %v187 = vunpack.c.l.b16 %v172
      %v188 = vunpack.c.l.b16 %v173
      %v189 = vpack.c.b16 %v186, %v185
      %v190 = vpack.c.b16 %v188, %v187
      %v194 = vsel %vm105, %v159, 0
      %196 = vmatprep.subr.bf16.mxu0 0
      %197 = vmatpush1.bf16.msra.mxu0 %v189
      %198 = vmatprep.subr.bf16.mxu0 0
      %199 = vmatpush1.bf16.msra.mxu0 %v190
      %200 = vmatprep.subr.bf16.mxu0 0
      %201 = vmatpush1.bf16.msra.mxu0 0
      %202 = vmatprep.subr.bf16.mxu0 0
      %203 = vmatpush1.bf16.msra.mxu0 0
      %204 = vmatprep.subr.bf16.mxu0 0
      %205 = vmatpush1.bf16.msra.mxu0 0
      %206 = vmatprep.subr.bf16.mxu0 0
      %207 = vmatpush1.bf16.msra.mxu0 0
      %208 = vmatprep.subr.bf16.mxu0 0
      %209 = vmatpush1.bf16.msra.mxu0 0
      %210 = vmatprep.subr.bf16.mxu0 0
      %211 = vmatpush1.bf16.msra.mxu0 0
      %212 = vmatprep.subr.bf16.mxu0 0
      %213 = vmatpush1.bf16.msra.mxu0 0
      %214 = vmatprep.subr.bf16.mxu0 0
      %215 = vmatpush1.bf16.msra.mxu0 0
      %216 = vmatprep.subr.bf16.mxu0 0
      %217 = vmatpush1.bf16.msra.mxu0 0
      %218 = vmatprep.subr.bf16.mxu0 0
      %219 = vmatpush1.bf16.msra.mxu0 0
      %220 = vmatprep.subr.bf16.mxu0 0
      %221 = vmatpush1.bf16.msra.mxu0 0
      %222 = vmatprep.subr.bf16.mxu0 0
      %223 = vmatpush1.bf16.msra.mxu0 0
      %224 = vmatprep.subr.bf16.mxu0 0
      %225 = vmatpush1.bf16.msra.mxu0 0
      %226 = vmatprep.subr.bf16.mxu0 0
      %227 = vmatpush1.bf16.msra.mxu0 0
      %228 = vmatprep.mubr.bf16.mxu0 0
      %229 = vmatmul.mubr.bf16.gmra.mrb[0].mxu0 %v194
      %v230 = vpop.f32.mrb[0].mxu0
      %v231 = vadd.f32 %v179, %v230
      %v232 = vpop.f32.mrb[0].mxu0
      %v233 = vpop.f32.mrb[0].mxu0
      %v234 = vadd.f32 %v179, %v233
      %v235 = vpop.f32.mrb[0].mxu0
      %236 = vdwg.mxu0
      %237 = vst [vmem:[#allocation10] sm:$0xff] %v231
      %238 = vst [vmem:[#allocation10 + $0x8] sm:$0xff] %v234
    $region41: #{tpu_custom_call.1} parent=1 // pred_fallthru
      _
    // Predicated region
    $region42: #{tpu_custom_call.1} parent=1 // pred_check
      _
    $region43: #{tpu_custom_call.1} parent=1 // pred_check_branch
      %240 = sbr.rel (0) target = $region45
    $region44: #{tpu_custom_call.1} parent=1 // pred_region
      %s242 = ssub.s32 128, 128
      %243 = vsyncadd [#allocation5], %s242
      %s244 = sshll.u32 [#allocation9], 4
      %s245 = int_to_ptr.vmem [resolvable:$true] %s244
      %250 = dma.vmem_to_hbm [thread:$0]  %s245, 128, %s5, [#allocation5], 64, 64, 4
    $region45: #{tpu_custom_call.1} parent=1 // pred_fallthru
      _
    // Predicated region
    $region46: #{tpu_custom_call.1} parent=1 // pred_check
      _
    $region47: #{tpu_custom_call.1} parent=1 // pred_check_branch
      %252 = sbr.rel (0) target = $region49
    $region48: #{tpu_custom_call.1} parent=1 // pred_region
      %s254 = ssub.s32 256, 256
      %255 = vsyncadd [#allocation11], %s254
      %s256 = sshll.u32 [#allocation10], 4
      %s257 = int_to_ptr.vmem [resolvable:$true] %s256
      %262 = dma.vmem_to_hbm [thread:$0]  %s257, 256, %s6, [#allocation11], 128, 128, 8
    $region49: #{tpu_custom_call.1} parent=1 // pred_fallthru
      _
    // Predicated region
    $region50: #{tpu_custom_call.1} parent=1 // pred_check
      _
    $region51: #{tpu_custom_call.1} parent=1 // pred_check_branch
      %264 = sbr.rel (0) target = $region53
    $region52: #{tpu_custom_call.1} parent=1 // pred_region
      %265 = dma.done [#allocation5], 128
    $region53: #{tpu_custom_call.1} parent=1 // pred_fallthru
      _
    // Predicated region
    $region54: #{tpu_custom_call.1} parent=1 // pred_check
      _
    $region55: #{tpu_custom_call.1} parent=1 // pred_check_branch
      %267 = sbr.rel (0) target = $region57
    $region56: #{tpu_custom_call.1} parent=1 // pred_region
      %268 = dma.done [#allocation11], 256
    $region57: #{tpu_custom_call.1} parent=1 // pred_fallthru
      _
    %269 = vsyncpa [#allocation4], 1
    %270 = vsyncpa [#allocation7], 1
    %271 = vsyncpa [#allocation5], 1
    %272 = vsyncpa [#allocation11], 1

</llo_original>
